<compile_context>
chip_gen: v7x
topology: tpu7x:2x2x1
jax: 0.10.0
libtpu: 0.0.40
codegen_flags: <defaults>
</compile_context>

<pallas_src>
import jax
import jax.numpy as jnp
from jax.experimental import pallas as pl
from jax.experimental.pallas import tpu as pltpu


def _round_up(x, m):
    return (x + m - 1) // m * m


def _critic_kernel(s_ref, a_ref, w1s_ref, w1a_ref, b1_ref,
                   w2_ref, b2_ref, w3_ref, b3_ref, out_ref):
    # Layer 1, fused concat: sa @ W1 == state @ W1[:S] + action @ W1[S:].
    h1 = jnp.dot(s_ref[...], w1s_ref[...], preferred_element_type=jnp.float32)
    h1 = h1 + jnp.dot(a_ref[...], w1a_ref[...],
                      preferred_element_type=jnp.float32)
    # ReLU + bf16 cast fused: halves the live intermediate footprint.
    h1 = jnp.maximum(h1 + b1_ref[...], 0.0).astype(jnp.bfloat16)   # (TB, 512)

    # Layer 2.
    h2 = jnp.dot(h1, w2_ref[...], preferred_element_type=jnp.float32)
    h2 = jnp.maximum(h2 + b2_ref[...], 0.0).astype(jnp.bfloat16)   # (TB, 384)

    # Layer 3: single output column -> VPU multiply + lane reduction in f32.
    # Avoids a padded (TB, 128) matmul/store; writes a narrow (TB, 1) block.
    q = jnp.sum(h2.astype(jnp.float32) * w3_ref[...], axis=-1, keepdims=True)
    out_ref[...] = q + b3_ref[...]                                  # (TB, 1) f32


def _choose_batch_tile(batch, batch_tile):
    """Multiple of 8, <= batch_tile, and >= 2 grid steps when batch > 8
    (so the 'parallel' axis can be sharded across both v7x TensorCores)
    while keeping row padding small."""
    cap = max(8, _round_up(int(batch_tile), 8))
    if batch <= 8:
        return min(cap, 8)
    half = _round_up(-(-batch // 2), 8)          # ceil(batch/2) rounded to 8
    return min(cap, half)


def critic_forward(state, action, params, *, batch_tile=1024):
    """state: (B, state_dim), action: (B, action_dim) -> (B, 1) float32."""
    w1s, w1a, b1, w2, b2, w3, b3 = params
    B, state_dim = state.shape
    action_dim = action.shape[1]
    h1p = w1s.shape[1]
    h2p = w2.shape[1]

    tb = _choose_batch_tile(B, batch_tile)
    b_pad = _round_up(B, tb)

    # Cast inputs to bf16 in the wrapper (halves the kernel's input DMA).
    state = state.astype(jnp.bfloat16)
    action = action.astype(jnp.bfloat16)
    if b_pad != B:
        state = jnp.pad(state, ((0, b_pad - B), (0, 0)))
        action = jnp.pad(action, ((0, b_pad - B), (0, 0)))

    def row_spec(feat):                       # tiled over batch
        return pl.BlockSpec((tb, feat), lambda i: (i, 0))

    def resident_spec(arr):                   # whole array, constant block idx
        return pl.BlockSpec(arr.shape, lambda i: (0, 0))

    param_bytes = sum(int(p.size) * p.dtype.itemsize for p in params)
    cost = pl.CostEstimate(
        flops=2 * b_pad * ((state_dim + action_dim) * h1p + h1p * h2p + h2p),
        transcendentals=0,
        bytes_accessed=(b_pad * (state_dim + action_dim) * 2   # bf16 inputs
                        + param_bytes
                        + b_pad * 4))                          # f32 output

    out = pl.pallas_call(
        _critic_kernel,
        out_shape=jax.ShapeDtypeStruct((b_pad, 1), jnp.float32),
        grid=(b_pad // tb,),
        in_specs=[
            row_spec(state_dim), row_spec(action_dim),
            resident_spec(w1s), resident_spec(w1a), resident_spec(b1),
            resident_spec(w2), resident_spec(b2),
            resident_spec(w3), resident_spec(b3),
        ],
        out_specs=pl.BlockSpec((tb, 1), lambda i: (i, 0)),
        compiler_params=pltpu.CompilerParams(
            dimension_semantics=("parallel",)),
        cost_estimate=cost,
    )(state, action, w1s, w1a, b1, w2, b2, w3, b3)

    return out if b_pad == B else out[:B]


def init_critic_params(key, state_dim, action_dim, h1=400, h2=300):
    """nn.Linear-style U(-1/sqrt(fan_in), 1/sqrt(fan_in)) init, with:
       - W1 pre-split into state/action halves (fused concat),
       - hidden dims zero-padded to 128-lane multiples (400->512, 300->384),
       - W1/W2 in bf16 (MXU inputs); biases and the W3 row in f32."""
    h1p, h2p = _round_up(h1, 128), _round_up(h2, 128)

    def linear(k, fan_in, fan_out, pad_in, pad_out):
        kw, kb = jax.random.split(k)
        bound = 1.0 / jnp.sqrt(float(fan_in))
        w = jax.random.uniform(kw, (fan_in, fan_out), jnp.float32,
                               minval=-bound, maxval=bound)
        b = jax.random.uniform(kb, (1, fan_out), jnp.float32,
                               minval=-bound, maxval=bound)
        w = jnp.pad(w, ((0, pad_in - fan_in), (0, pad_out - fan_out)))
        b = jnp.pad(b, ((0, 0), (0, pad_out - fan_out)))
        return w, b

    k1, k2, k3 = jax.random.split(key, 3)
    sa_dim = state_dim + action_dim
    w1, b1 = linear(k1, sa_dim, h1, sa_dim, h1p)
    w2, b2 = linear(k2, h1, h2, h1p, h2p)
    w3, b3 = linear(k3, h2, 1, h2p, 1)        # W3: single real output column

    w1s = w1[:state_dim].astype(jnp.bfloat16)
    w1a = w1[state_dim:].astype(jnp.bfloat16)
    w3_row = jnp.transpose(w3)                 # (1, h2p) f32 row vector
    b3_scalar = b3                             # (1, 1) f32
    return (w1s, w1a, b1,
            w2.astype(jnp.bfloat16), b2,
            w3_row, b3_scalar)


def critic_reference(state, action, params):
    """Pure-JAX reference emulating the kernel numerics
    (bf16 MXU inputs, f32 accumulation, bf16 activations, zero padding).
    # TODO(synk): an exact-f32 PyTorch-parity path would skip the bf16 casts;
    # results diverge slightly from a pure f32 Critic for large inputs."""
    w1s, w1a, b1, w2, b2, w3, b3 = params
    bf = jnp.bfloat16
    h1 = (jnp.dot(state.astype(bf), w1s, preferred_element_type=jnp.float32)
          + jnp.dot(action.astype(bf), w1a, preferred_element_type=jnp.float32))
    h1 = jnp.maximum(h1 + b1, 0.0).astype(bf)
    h2 = jnp.dot(h1, w2, preferred_element_type=jnp.float32)
    h2 = jnp.maximum(h2 + b2, 0.0).astype(bf)
    q = jnp.sum(h2.astype(jnp.float32) * w3, axis=-1, keepdims=True) + b3
    return q


if __name__ == "__main__":
    B, STATE_DIM, ACTION_DIM = 2, 16, 4

    key = jax.random.PRNGKey(0)
    k_params, k_state, k_action = jax.random.split(key, 3)

    params = init_critic_params(k_params, STATE_DIM, ACTION_DIM)
    state = jax.random.normal(k_state, (B, STATE_DIM), jnp.float32)
    action = jax.random.normal(k_action, (B, ACTION_DIM), jnp.float32)

    q = critic_forward(state, action, params)
    jax.block_until_ready(q)

    q_ref = critic_reference(state, action, params)
    assert q.shape == (B, 1), q.shape
    assert jnp.allclose(q, q_ref, atol=1e-3, rtol=1e-3), (q, q_ref)

    print("KERNEL_OK")
</pallas_src>

<mosaic_0001>
module attributes {stable_mosaic.version = 11 : i64} {
  func.func @_critic_kernel(%arg0: i32, %arg1: memref<8x16xbf16, #tpu.memory_space<vmem>>, %arg2: memref<8x4xbf16, #tpu.memory_space<vmem>>, %arg3: memref<16x512xbf16, #tpu.memory_space<vmem>>, %arg4: memref<4x512xbf16, #tpu.memory_space<vmem>>, %arg5: memref<1x512xf32, #tpu.memory_space<vmem>>, %arg6: memref<512x384xbf16, #tpu.memory_space<vmem>>, %arg7: memref<1x384xf32, #tpu.memory_space<vmem>>, %arg8: memref<1x384xf32, #tpu.memory_space<vmem>>, %arg9: memref<1x1xf32, #tpu.memory_space<vmem>>, %arg10: memref<8x1xf32, #tpu.memory_space<vmem>>) attributes {dimension_semantics = [#tpu.dimension_semantics<parallel>], iteration_bounds = array<i64: 1>, scalar_prefetch = 0 : i64, scratch_operands = 0 : i64, tpu.core_type = #tpu.core_type<tc>, window_params = [{transform_indices = @transform_0, window_bounds = array<i64: 8, 16>}, {transform_indices = @transform_1, window_bounds = array<i64: 8, 4>}, {pipeline_mode = #tpu.pipeline_mode<synchronous>, transform_indices = @transform_2, window_bounds = array<i64: 16, 512>}, {pipeline_mode = #tpu.pipeline_mode<synchronous>, transform_indices = @transform_3, window_bounds = array<i64: 4, 512>}, {pipeline_mode = #tpu.pipeline_mode<synchronous>, transform_indices = @transform_4, window_bounds = array<i64: 1, 512>}, {pipeline_mode = #tpu.pipeline_mode<synchronous>, transform_indices = @transform_5, window_bounds = array<i64: 512, 384>}, {pipeline_mode = #tpu.pipeline_mode<synchronous>, transform_indices = @transform_6, window_bounds = array<i64: 1, 384>}, {pipeline_mode = #tpu.pipeline_mode<synchronous>, transform_indices = @transform_7, window_bounds = array<i64: 1, 384>}, {pipeline_mode = #tpu.pipeline_mode<synchronous>, transform_indices = @transform_8, window_bounds = array<i64: 1, 1>}, {transform_indices = @transform_9, window_bounds = array<i64: 8, 1>}]} {
    %c0 = arith.constant 0 : index
    %c0_0 = arith.constant 0 : index
    %0 = vector.load %arg1[%c0, %c0_0] : memref<8x16xbf16, #tpu.memory_space<vmem>>, vector<8x16xbf16>
    %c0_1 = arith.constant 0 : index
    %c0_2 = arith.constant 0 : index
    %1 = vector.load %arg3[%c0_1, %c0_2] : memref<16x512xbf16, #tpu.memory_space<vmem>>, vector<16x512xbf16>
    %cst = arith.constant dense<0.000000e+00> : vector<8x512xf32>
    %2 = tpu.matmul %0, %1, %cst {dimension_numbers = #tpu.dot_dimension_numbers<[1], [0], [0], [1], [0, 0, 1, 1], [], []>} : vector<8x16xbf16>, vector<16x512xbf16>, vector<8x512xf32> -> vector<8x512xf32>
    %c0_3 = arith.constant 0 : index
    %c0_4 = arith.constant 0 : index
    %3 = vector.load %arg2[%c0_3, %c0_4] : memref<8x4xbf16, #tpu.memory_space<vmem>>, vector<8x4xbf16>
    %c0_5 = arith.constant 0 : index
    %c0_6 = arith.constant 0 : index
    %4 = vector.load %arg4[%c0_5, %c0_6] : memref<4x512xbf16, #tpu.memory_space<vmem>>, vector<4x512xbf16>
    %cst_7 = arith.constant dense<0.000000e+00> : vector<8x512xf32>
    %5 = tpu.matmul %3, %4, %cst_7 {dimension_numbers = #tpu.dot_dimension_numbers<[1], [0], [0], [1], [0, 0, 1, 1], [], []>} : vector<8x4xbf16>, vector<4x512xbf16>, vector<8x512xf32> -> vector<8x512xf32>
    %6 = arith.addf %2, %5 : vector<8x512xf32>
    %c0_8 = arith.constant 0 : index
    %c0_9 = arith.constant 0 : index
    %7 = vector.load %arg5[%c0_8, %c0_9] : memref<1x512xf32, #tpu.memory_space<vmem>>, vector<1x512xf32>
    %8 = vector.broadcast %7 : vector<1x512xf32> to vector<8x512xf32>
    %9 = arith.addf %6, %8 : vector<8x512xf32>
    %cst_10 = arith.constant 0.000000e+00 : f32
    %10 = vector.broadcast %cst_10 : f32 to vector<8x512xf32>
    %11 = arith.maximumf %9, %10 : vector<8x512xf32>
    %12 = arith.truncf %11 : vector<8x512xf32> to vector<8x512xbf16>
    %c0_11 = arith.constant 0 : index
    %c0_12 = arith.constant 0 : index
    %13 = vector.load %arg6[%c0_11, %c0_12] : memref<512x384xbf16, #tpu.memory_space<vmem>>, vector<512x384xbf16>
    %cst_13 = arith.constant dense<0.000000e+00> : vector<8x384xf32>
    %14 = tpu.matmul %12, %13, %cst_13 {dimension_numbers = #tpu.dot_dimension_numbers<[1], [0], [0], [1], [0, 0, 1, 1], [], []>} : vector<8x512xbf16>, vector<512x384xbf16>, vector<8x384xf32> -> vector<8x384xf32>
    %c0_14 = arith.constant 0 : index
    %c0_15 = arith.constant 0 : index
    %15 = vector.load %arg7[%c0_14, %c0_15] : memref<1x384xf32, #tpu.memory_space<vmem>>, vector<1x384xf32>
    %16 = vector.broadcast %15 : vector<1x384xf32> to vector<8x384xf32>
    %17 = arith.addf %14, %16 : vector<8x384xf32>
    %cst_16 = arith.constant 0.000000e+00 : f32
    %18 = vector.broadcast %cst_16 : f32 to vector<8x384xf32>
    %19 = arith.maximumf %17, %18 : vector<8x384xf32>
    %20 = arith.truncf %19 : vector<8x384xf32> to vector<8x384xbf16>
    %21 = arith.extf %20 : vector<8x384xbf16> to vector<8x384xf32>
    %c0_17 = arith.constant 0 : index
    %c0_18 = arith.constant 0 : index
    %22 = vector.load %arg8[%c0_17, %c0_18] : memref<1x384xf32, #tpu.memory_space<vmem>>, vector<1x384xf32>
    %23 = vector.broadcast %22 : vector<1x384xf32> to vector<8x384xf32>
    %24 = arith.mulf %21, %23 : vector<8x384xf32>
    %cst_19 = arith.constant dense<0.000000e+00> : vector<8xf32>
    %25 = vector.multi_reduction <add>, %24, %cst_19 [1] : vector<8x384xf32> to vector<8xf32>
    %26 = vector.shape_cast %25 : vector<8xf32> to vector<8x1xf32>
    %c0_20 = arith.constant 0 : index
    %c0_21 = arith.constant 0 : index
    %27 = vector.load %arg9[%c0_20, %c0_21] : memref<1x1xf32, #tpu.memory_space<vmem>>, vector<1x1xf32>
    %28 = vector.broadcast %27 : vector<1x1xf32> to vector<8x1xf32>
    %29 = arith.addf %26, %28 : vector<8x1xf32>
    %c0_22 = arith.constant 0 : index
    %c0_23 = arith.constant 0 : index
    %30 = vector.load %arg10[%c0_22, %c0_23] : memref<8x1xf32, #tpu.memory_space<vmem>>, vector<8x1xf32>
    tpu.vector_store %arg10[%c0_22, %c0_23], %29 {strides = array<i32>} : memref<8x1xf32, #tpu.memory_space<vmem>>, vector<8x1xf32>,
    return
  }
  func.func @transform_0(%arg0: i32) -> (i32, i32) {
    %c0_i32 = arith.constant 0 : i32
    %c0_i32_0 = arith.constant 0 : i32
    return %arg0, %c0_i32 : i32, i32
  }
  func.func @transform_1(%arg0: i32) -> (i32, i32) {
    %c0_i32 = arith.constant 0 : i32
    %c0_i32_0 = arith.constant 0 : i32
    return %arg0, %c0_i32 : i32, i32
  }
  func.func @transform_2(%arg0: i32) -> (i32, i32) {
    %c0_i32 = arith.constant 0 : i32
    %c0_i32_0 = arith.constant 0 : i32
    %c0_i32_1 = arith.constant 0 : i32
    return %c0_i32, %c0_i32_0 : i32, i32
  }
  func.func @transform_3(%arg0: i32) -> (i32, i32) {
    %c0_i32 = arith.constant 0 : i32
    %c0_i32_0 = arith.constant 0 : i32
    %c0_i32_1 = arith.constant 0 : i32
    return %c0_i32, %c0_i32_0 : i32, i32
  }
  func.func @transform_4(%arg0: i32) -> (i32, i32) {
    %c0_i32 = arith.constant 0 : i32
    %c0_i32_0 = arith.constant 0 : i32
    %c0_i32_1 = arith.constant 0 : i32
    return %c0_i32, %c0_i32_0 : i32, i32
  }
  func.func @transform_5(%arg0: i32) -> (i32, i32) {
    %c0_i32 = arith.constant 0 : i32
    %c0_i32_0 = arith.constant 0 : i32
    %c0_i32_1 = arith.constant 0 : i32
    return %c0_i32, %c0_i32_0 : i32, i32
  }
  func.func @transform_6(%arg0: i32) -> (i32, i32) {
    %c0_i32 = arith.constant 0 : i32
    %c0_i32_0 = arith.constant 0 : i32
    %c0_i32_1 = arith.constant 0 : i32
    return %c0_i32, %c0_i32_0 : i32, i32
  }
  func.func @transform_7(%arg0: i32) -> (i32, i32) {
    %c0_i32 = arith.constant 0 : i32
    %c0_i32_0 = arith.constant 0 : i32
    %c0_i32_1 = arith.constant 0 : i32
    return %c0_i32, %c0_i32_0 : i32, i32
  }
  func.func @transform_8(%arg0: i32) -> (i32, i32) {
    %c0_i32 = arith.constant 0 : i32
    %c0_i32_0 = arith.constant 0 : i32
    %c0_i32_1 = arith.constant 0 : i32
    return %c0_i32, %c0_i32_0 : i32, i32
  }
  func.func @transform_9(%arg0: i32) -> (i32, i32) {
    %c0_i32 = arith.constant 0 : i32
    %c0_i32_0 = arith.constant 0 : i32
    return %arg0, %c0_i32 : i32, i32
  }
}

</mosaic_0001>

<llo_original>
// kernel: tpu_custom_call.1
$region0: #{tpu_custom_call.1}
  #allocation0 [shape = 'u32[]', space=smem, size = 0x4, offset = 0x4, fixed_abs, tag = 'smem constant byte address 0x4 - core index']
  #allocation1 [shape = 'u32[144,128]{1,0:T(1,128)}', space=vmem, size = 0x12000, scoped, tag = 'internal scratch']
  #allocation2 [shape = 'f32[1,1]{1,0:T(1,128)S(1)}', space=vmem, size = 0x200, scoped, tag = 'scoped memory for tpu_custom_call.1']
  %s0 = inlined_call_operand.vmem [shape: bf16[8,16], index: 0, kind: input, shape index: {}]
  %s1 = inlined_call_operand.vmem [shape: bf16[8,4], index: 1, kind: input, shape index: {}]
  %s2 = inlined_call_operand.hbm [shape: bf16[16,512], index: 2, kind: input, shape index: {}]
  %s3 = inlined_call_operand.vmem [shape: bf16[4,512], index: 3, kind: input, shape index: {}]
  %s4 = inlined_call_operand.vmem [shape: f32[1,512], index: 4, kind: input, shape index: {}]
  %s5 = inlined_call_operand.hbm [shape: bf16[512,384], index: 5, kind: input, shape index: {}]
  %s6 = inlined_call_operand.vmem [shape: f32[1,384], index: 6, kind: input, shape index: {}]
  %s7 = inlined_call_operand.vmem [shape: f32[1,384], index: 7, kind: input, shape index: {}]
  %s8 = inlined_call_operand.<no memory space> [shape: f32[1,1], index: 8, kind: input, shape index: {}]
  %s9 = inlined_call_operand.vmem [shape: f32[8,1], index: 9, kind: output, shape index: {}]
  %s10 = sld [smem:[#allocation0]]
  $region54: #{tpu_custom_call.1} parent=0
    _
  %s12 = ssub.s32 1, %s10
  %s13 = scalar_select 0, %s12, %s10
  %v14 = vstv %s8
  %15 = vst [vmem:[#allocation2] sm:$0x1] %v14
  $region1: #{tpu_custom_call.1} parent=0
    #allocation3 [shape = 'u8[16384]{0}', space=vmem, size = 0x4000, scoped, tag = 'input window, operand 2, single buffered']
    #allocation4 [shape = 's32[1]{0}', space=sflag, size = 0x4, scoped, tag = 'scoped memory for tpu_custom_call.1']
    #allocation5 [shape = 'u8[393216]{0}', space=vmem, size = 0x60000, scoped, tag = 'input window, operand 5, single buffered']
    #allocation6 [shape = 's32[1]{0}', space=sflag, size = 0x4, scoped, tag = 'scoped memory for tpu_custom_call.1']
    %16 = vsyncpa [#allocation4], 0
    %17 = vsyncpa [#allocation6], 0
    // Predicated region
    $region2: #{tpu_custom_call.1} parent=1 // pred_check
      _
    $region3: #{tpu_custom_call.1} parent=1 // pred_check_branch
      %19 = sbr.rel (0) target = $region5
    $region4: #{tpu_custom_call.1} parent=1 // pred_region
      _
    $region5: #{tpu_custom_call.1} parent=1 // pred_fallthru
      _
    // Predicated region
    $region6: #{tpu_custom_call.1} parent=1 // pred_check
      _
    $region7: #{tpu_custom_call.1} parent=1 // pred_check_branch
      %21 = sbr.rel (0) target = $region9
    $region8: #{tpu_custom_call.1} parent=1 // pred_region
      _
    $region9: #{tpu_custom_call.1} parent=1 // pred_fallthru
      _
    // Predicated region
    $region10: #{tpu_custom_call.1} parent=1 // pred_check
      _
    $region11: #{tpu_custom_call.1} parent=1 // pred_check_branch
      %23 = sbr.rel (0) target = $region13
    $region12: #{tpu_custom_call.1} parent=1 // pred_region
      %s25 = ssub.s32 512, 512
      %26 = vsyncadd [#allocation4], %s25
      %s27 = sshll.u32 [#allocation3], 4
      %s28 = int_to_ptr.vmem [resolvable:$true] %s27
      %33 = dma.hbm_to_vmem [thread:$0]  %s2, 512, %s28, [#allocation4], 256, 256, 16
    $region13: #{tpu_custom_call.1} parent=1 // pred_fallthru
      _
    // Predicated region
    $region14: #{tpu_custom_call.1} parent=1 // pred_check
      _
    $region15: #{tpu_custom_call.1} parent=1 // pred_check_branch
      %35 = sbr.rel (0) target = $region17
    $region16: #{tpu_custom_call.1} parent=1 // pred_region
      _
    $region17: #{tpu_custom_call.1} parent=1 // pred_fallthru
      _
    // Predicated region
    $region18: #{tpu_custom_call.1} parent=1 // pred_check
      _
    $region19: #{tpu_custom_call.1} parent=1 // pred_check_branch
      %37 = sbr.rel (0) target = $region21
    $region20: #{tpu_custom_call.1} parent=1 // pred_region
      _
    $region21: #{tpu_custom_call.1} parent=1 // pred_fallthru
      _
    // Predicated region
    $region22: #{tpu_custom_call.1} parent=1 // pred_check
      _
    $region23: #{tpu_custom_call.1} parent=1 // pred_check_branch
      %39 = sbr.rel (0) target = $region25
    $region24: #{tpu_custom_call.1} parent=1 // pred_region
      %s41 = ssub.s32 12288, 12288
      %42 = vsyncadd [#allocation6], %s41
      %s43 = sshll.u32 [#allocation5], 4
      %s44 = int_to_ptr.vmem [resolvable:$true] %s43
      %49 = dma.hbm_to_vmem [thread:$0]  %s5, 12288, %s44, [#allocation6], 192, 192, 12
    $region25: #{tpu_custom_call.1} parent=1 // pred_fallthru
      _
    // Predicated region
    $region26: #{tpu_custom_call.1} parent=1 // pred_check
      _
    $region27: #{tpu_custom_call.1} parent=1 // pred_check_branch
      %51 = sbr.rel (0) target = $region29
    $region28: #{tpu_custom_call.1} parent=1 // pred_region
      _
    $region29: #{tpu_custom_call.1} parent=1 // pred_fallthru
      _
    // Predicated region
    $region30: #{tpu_custom_call.1} parent=1 // pred_check
      _
    $region31: #{tpu_custom_call.1} parent=1 // pred_check_branch
      %53 = sbr.rel (0) target = $region33
    $region32: #{tpu_custom_call.1} parent=1 // pred_region
      _
    $region33: #{tpu_custom_call.1} parent=1 // pred_fallthru
      _
    // Predicated region
    $region34: #{tpu_custom_call.1} parent=1 // pred_check
      _
    $region35: #{tpu_custom_call.1} parent=1 // pred_check_branch
      %55 = sbr.rel (0) target = $region37
    $region36: #{tpu_custom_call.1} parent=1 // pred_region
      _
    $region37: #{tpu_custom_call.1} parent=1 // pred_fallthru
      _
    // Predicated region
    $region38: #{tpu_custom_call.1} parent=1 // pred_check
      _
    $region39: #{tpu_custom_call.1} parent=1 // pred_check_branch
      %57 = sbr.rel (0) target = $region41
    $region40: #{tpu_custom_call.1} parent=1 // pred_region
      %58 = dma.done [#allocation4], 512
    $region41: #{tpu_custom_call.1} parent=1 // pred_fallthru
      _
    // Predicated region
    $region42: #{tpu_custom_call.1} parent=1 // pred_check
      _
    $region43: #{tpu_custom_call.1} parent=1 // pred_check_branch
      %60 = sbr.rel (0) target = $region45
    $region44: #{tpu_custom_call.1} parent=1 // pred_region
      %61 = dma.done [#allocation6], 12288
    $region45: #{tpu_custom_call.1} parent=1 // pred_fallthru
      _
    %v63 = vld [vmem:[%s0] sm:$0xf]
    %v64 = vld [vmem:[#allocation3] sm:$0xff]
    %v65 = vld [vmem:[#allocation3 + $0x8] sm:$0xff]
    %v66 = vld [vmem:[#allocation3 + $0x10] sm:$0xff]
    %v67 = vld [vmem:[#allocation3 + $0x18] sm:$0xff]
    %v68 = vld [vmem:[%s1] sm:$0xf]
    %v69 = vld [vmem:[%s3] sm:$0xff]
    %v71 = vcombine.high %v69, %v69
    %v73 = vunpack.c.l.s4 1983009808
    %v74 = vunpack.c.0.s8 %v73
    %v75 = vlaneseq
    %v76 = vshrl.u32 %v75, 7
    %v77 = vsub.s32 %v74, %v76
    %v78 = vrot.slane %v69, %v77
    %v80 = vunpack.c.l.s4 1983009808
    %v81 = vunpack.c.0.s8 %v80
    %v82 = vlaneseq
    %v83 = vshrl.u32 %v82, 7
    %v84 = vsub.s32 %v81, %v83
    %v85 = vrot.slane %v71, %v84
    %v86 = vcombine.high %v78, %v78
    %v87 = vcombine.high %v85, %v85
    %vm88 = vcmask 31744
    %v90 = vsel %vm88, %v68, 0
    %vm92 = vcmask 1041408
    %v94 = vsel %vm92, %v78, 0
    %v97 = vsel %vm92, %v86, 0
    %v100 = vsel %vm92, %v85, 0
    %v103 = vsel %vm92, %v87, 0
    %105 = vmatprep.subr.bf16.mxu0 %v97
    %106 = vmatpush1.bf16.msra.mxu0 %v94
    %107 = vmatprep.subr.bf16.mxu0 0
    %108 = vmatpush1.bf16.msra.mxu0 0
    %109 = vmatprep.subr.bf16.mxu0 0
    %110 = vmatpush1.bf16.msra.mxu0 0
    %111 = vmatprep.subr.bf16.mxu0 0
    %112 = vmatpush1.bf16.msra.mxu0 0
    %113 = vmatprep.subr.bf16.mxu0 0
    %114 = vmatpush1.bf16.msra.mxu0 0
    %115 = vmatprep.subr.bf16.mxu0 0
    %116 = vmatpush1.bf16.msra.mxu0 0
    %117 = vmatprep.subr.bf16.mxu0 0
    %118 = vmatpush1.bf16.msra.mxu0 0
    %119 = vmatprep.subr.bf16.mxu0 0
    %120 = vmatpush1.bf16.msra.mxu0 0
    %121 = vmatprep.subr.bf16.mxu0 0
    %122 = vmatpush1.bf16.msra.mxu0 0
    %123 = vmatprep.subr.bf16.mxu0 0
    %124 = vmatpush1.bf16.msra.mxu0 0
    %125 = vmatprep.subr.bf16.mxu0 0
    %126 = vmatpush1.bf16.msra.mxu0 0
    %127 = vmatprep.subr.bf16.mxu0 0
    %128 = vmatpush1.bf16.msra.mxu0 0
    %129 = vmatprep.subr.bf16.mxu0 0
    %130 = vmatpush1.bf16.msra.mxu0 0
    %131 = vmatprep.subr.bf16.mxu0 0
    %132 = vmatpush1.bf16.msra.mxu0 0
    %133 = vmatprep.subr.bf16.mxu0 0
    %134 = vmatpush1.bf16.msra.mxu0 0
    %135 = vmatprep.subr.bf16.mxu0 0
    %136 = vmatpush1.bf16.msra.mxu0 0
    %137 = vmatprep.mubr.bf16.mxu0 0
    %138 = vmatmul.mubr.bf16.gmra.mrb[0].mxu0 %v90
    %v139 = vpop.f32.mrb[0].mxu0
    %v140 = vadd.f32 0.0, %v139
    %v141 = vpop.f32.mrb[0].mxu0
    %v142 = vadd.f32 0.0, %v141
    %v143 = vpop.f32.mrb[0].mxu0
    %v144 = vpop.f32.mrb[0].mxu0
    %145 = vdwg.mxu0
    %146 = vmatprep.subr.bf16.mxu0 %v103
    %147 = vmatpush1.bf16.msra.mxu0 %v100
    %148 = vmatprep.subr.bf16.mxu0 0
    %149 = vmatpush1.bf16.msra.mxu0 0
    %150 = vmatprep.subr.bf16.mxu0 0
    %151 = vmatpush1.bf16.msra.mxu0 0
    %152 = vmatprep.subr.bf16.mxu0 0
    %153 = vmatpush1.bf16.msra.mxu0 0
    %154 = vmatprep.subr.bf16.mxu0 0
    %155 = vmatpush1.bf16.msra.mxu0 0
    %156 = vmatprep.subr.bf16.mxu0 0
    %157 = vmatpush1.bf16.msra.mxu0 0
    %158 = vmatprep.subr.bf16.mxu0 0
    %159 = vmatpush1.bf16.msra.mxu0 0
    %160 = vmatprep.subr.bf16.mxu0 0
    %161 = vmatpush1.bf16.msra.mxu0 0
    %162 = vmatprep.subr.bf16.mxu0 0
    %163 = vmatpush1.bf16.msra.mxu0 0
    %164 = vmatprep.subr.bf16.mxu0 0
    %165 = vmatpush1.bf16.msra.mxu0 0
    %166 = vmatprep.subr.bf16.mxu0 0
    %167 = vmatpush1.bf16.msra.mxu0 0
    %168 = vmatprep.subr.bf16.mxu0 0
    %169 = vmatpush1.bf16.msra.mxu0 0
    %170 = vmatprep.subr.bf16.mxu0 0
    %171 = vmatpush1.bf16.msra.mxu0 0
    %172 = vmatprep.subr.bf16.mxu0 0
    %173 = vmatpush1.bf16.msra.mxu0 0
    %174 = vmatprep.subr.bf16.mxu0 0
    %175 = vmatpush1.bf16.msra.mxu0 0
    %176 = vmatprep.subr.bf16.mxu0 0
    %177 = vmatpush1.bf16.msra.mxu0 0
    %178 = vmatprep.mubr.bf16.mxu0 0
    %179 = vmatmul.mubr.bf16.gmra.mrb[0].mxu0 %v90
    %v180 = vpop.f32.mrb[0].mxu0
    %v181 = vadd.f32 0.0, %v180
    %v182 = vpop.f32.mrb[0].mxu0
    %v183 = vadd.f32 0.0, %v182
    %v184 = vpop.f32.mrb[0].mxu0
    %v185 = vpop.f32.mrb[0].mxu0
    %186 = vdwg.mxu0
    %v191 = vunpack.c.l.b16 %v64
    %v192 = vunpack.c.h.b16 %v64
    %v193 = vunpack.c.l.b16 %v65
    %v194 = vunpack.c.h.b16 %v65
    %v195 = vunpack.c.l.b16 %v66
    %v196 = vunpack.c.h.b16 %v66
    %v197 = vunpack.c.l.b16 %v67
    %v198 = vunpack.c.h.b16 %v67
    %v199 = vpack.c.b16 %v195, %v191
    %v200 = vpack.c.b16 %v196, %v192
    %v201 = vpack.c.b16 %v197, %v193
    %v202 = vpack.c.b16 %v198, %v194
    %vm207 = vcmask 130048
    %v209 = vsel %vm207, %v63, 0
    %211 = vmatprep.subr.bf16.mxu0 %v200
    %212 = vmatpush1.bf16.msra.mxu0 %v199
    %213 = vmatprep.subr.bf16.mxu0 0
    %214 = vmatpush1.bf16.msra.mxu0 0
    %215 = vmatprep.subr.bf16.mxu0 0
    %216 = vmatpush1.bf16.msra.mxu0 0
    %217 = vmatprep.subr.bf16.mxu0 0
    %218 = vmatpush1.bf16.msra.mxu0 0
    %219 = vmatprep.subr.bf16.mxu0 0
    %220 = vmatpush1.bf16.msra.mxu0 0
    %221 = vmatprep.subr.bf16.mxu0 0
    %222 = vmatpush1.bf16.msra.mxu0 0
    %223 = vmatprep.subr.bf16.mxu0 0
    %224 = vmatpush1.bf16.msra.mxu0 0
    %225 = vmatprep.subr.bf16.mxu0 0
    %226 = vmatpush1.bf16.msra.mxu0 0
    %227 = vmatprep.subr.bf16.mxu0 0
    %228 = vmatpush1.bf16.msra.mxu0 0
    %229 = vmatprep.subr.bf16.mxu0 0
    %230 = vmatpush1.bf16.msra.mxu0 0
    %231 = vmatprep.subr.bf16.mxu0 0
    %232 = vmatpush1.bf16.msra.mxu0 0
    %233 = vmatprep.subr.bf16.mxu0 0
    %234 = vmatpush1.bf16.msra.mxu0 0
    %235 = vmatprep.subr.bf16.mxu0 0
    %236 = vmatpush1.bf16.msra.mxu0 0
    %237 = vmatprep.subr.bf16.mxu0 0
    %238 = vmatpush1.bf16.msra.mxu0 0
    %239 = vmatprep.subr.bf16.mxu0 0
    %240 = vmatpush1.bf16.msra.mxu0 0
    %241 = vmatprep.subr.bf16.mxu0 0
    %242 = vmatpush1.bf16.msra.mxu0 0
    %243 = vmatprep.mubr.bf16.mxu0 0
    %244 = vmatmul.mubr.bf16.gmra.mrb[0].mxu0 %v209
    %v245 = vpop.f32.mrb[0].mxu0
    %v246 = vadd.f32 %v140, %v245
    %v247 = vpop.f32.mrb[0].mxu0
    %v248 = vadd.f32 %v142, %v247
    %v249 = vpop.f32.mrb[0].mxu0
    %v250 = vpop.f32.mrb[0].mxu0
    %251 = vdwg.mxu0
    %252 = vmatprep.subr.bf16.mxu0 %v202
    %253 = vmatpush1.bf16.msra.mxu0 %v201
    %254 = vmatprep.subr.bf16.mxu0 0
    %255 = vmatpush1.bf16.msra.mxu0 0
    %256 = vmatprep.subr.bf16.mxu0 0
    %257 = vmatpush1.bf16.msra.mxu0 0
    %258 = vmatprep.subr.bf16.mxu0 0
    %259 = vmatpush1.bf16.msra.mxu0 0
    %260 = vmatprep.subr.bf16.mxu0 0
    %261 = vmatpush1.bf16.msra.mxu0 0
    %262 = vmatprep.subr.bf16.mxu0 0
    %263 = vmatpush1.bf16.msra.mxu0 0
    %264 = vmatprep.subr.bf16.mxu0 0
    %265 = vmatpush1.bf16.msra.mxu0 0
    %266 = vmatprep.subr.bf16.mxu0 0
    %267 = vmatpush1.bf16.msra.mxu0 0
    %268 = vmatprep.subr.bf16.mxu0 0
    %269 = vmatpush1.bf16.msra.mxu0 0
    %270 = vmatprep.subr.bf16.mxu0 0
    %271 = vmatpush1.bf16.msra.mxu0 0
    %272 = vmatprep.subr.bf16.mxu0 0
    %273 = vmatpush1.bf16.msra.mxu0 0
    %274 = vmatprep.subr.bf16.mxu0 0
    %275 = vmatpush1.bf16.msra.mxu0 0
    %276 = vmatprep.subr.bf16.mxu0 0
    %277 = vmatpush1.bf16.msra.mxu0 0
    %278 = vmatprep.subr.bf16.mxu0 0
    %279 = vmatpush1.bf16.msra.mxu0 0
    %280 = vmatprep.subr.bf16.mxu0 0
    %281 = vmatpush1.bf16.msra.mxu0 0
    %282 = vmatprep.subr.bf16.mxu0 0
    %283 = vmatpush1.bf16.msra.mxu0 0
    %284 = vmatprep.mubr.bf16.mxu0 0
    %285 = vmatmul.mubr.bf16.gmra.mrb[0].mxu0 %v209
    %v286 = vpop.f32.mrb[0].mxu0
    %v287 = vadd.f32 %v181, %v286
    %v288 = vpop.f32.mrb[0].mxu0
    %v289 = vadd.f32 %v183, %v288
    %v290 = vpop.f32.mrb[0].mxu0
    %v291 = vpop.f32.mrb[0].mxu0
    %292 = vdwg.mxu0
    %v293 = vld [vmem:[%s4] sm:$0xf]
    %v295 = vlaneseq
    %v296 = vshrl.u32 %v295, 7
    %v297 = vsub.s32 0, %v296
    %v298 = vrot.slane %v293, %v297
    %v299 = vlaneseq
    %v300 = vshrl.u32 %v299, 7
    %v301 = vsub.s32 1, %v300
    %v302 = vrot.slane %v293, %v301
    %v303 = vlaneseq
    %v304 = vshrl.u32 %v303, 7
    %v305 = vsub.s32 2, %v304
    %v306 = vrot.slane %v293, %v305
    %v307 = vlaneseq
    %v308 = vshrl.u32 %v307, 7
    %v309 = vsub.s32 3, %v308
    %v310 = vrot.slane %v293, %v309
    %v315 = vadd.f32 %v246, %v298
    %v316 = vadd.f32 %v248, %v302
    %v317 = vadd.f32 %v287, %v306
    %v318 = vadd.f32 %v289, %v310
    %v319 = vmax.f32 %v315, 0.0
    %v320 = vmax.f32 %v316, 0.0
    %v321 = vmax.f32 %v317, 0.0
    %v322 = vmax.f32 %v318, 0.0
    %v323 = vpack.c.bf16 %v319, %v319
    %v324 = vpack.c.bf16 %v320, %v320
    %v325 = vpack.c.bf16 %v321, %v321
    %v326 = vpack.c.bf16 %v322, %v322
    %v327 = vld [vmem:[#allocation5] sm:$0xff]
    %v328 = vld [vmem:[#allocation5 + $0x8] sm:$0xf]
    %v329 = vld [vmem:[#allocation5 + $0xc] sm:$0xff]
    %v330 = vld [vmem:[#allocation5 + $0x14] sm:$0xf]
    %v331 = vld [vmem:[#allocation5 + $0x18] sm:$0xff]
    %v332 = vld [vmem:[#allocation5 + $0x20] sm:$0xf]
    %v333 = vld [vmem:[#allocation5 + $0x24] sm:$0xff]
    %v334 = vld [vmem:[#allocation5 + $0x2c] sm:$0xf]
    %v335 = vld [vmem:[#allocation5 + $0x30] sm:$0xff]
    %v336 = vld [vmem:[#allocation5 + $0x38] sm:$0xf]
    %v337 = vld [vmem:[#allocation5 + $0x3c] sm:$0xff]
    %v338 = vld [vmem:[#allocation5 + $0x44] sm:$0xf]
    %v339 = vld [vmem:[#allocation5 + $0x48] sm:$0xff]
    %v340 = vld [vmem:[#allocation5 + $0x50] sm:$0xf]
    %v341 = vld [vmem:[#allocation5 + $0x54] sm:$0xff]
    %v342 = vld [vmem:[#allocation5 + $0x5c] sm:$0xf]
    %v343 = vld [vmem:[#allocation5 + $0x60] sm:$0xff]
    %v344 = vld [vmem:[#allocation5 + $0x68] sm:$0xf]
    %v345 = vld [vmem:[#allocation5 + $0x6c] sm:$0xff]
    %v346 = vld [vmem:[#allocation5 + $0x74] sm:$0xf]
    %v347 = vld [vmem:[#allocation5 + $0x78] sm:$0xff]
    %v348 = vld [vmem:[#allocation5 + $0x80] sm:$0xf]
    %v349 = vld [vmem:[#allocation5 + $0x84] sm:$0xff]
    %v350 = vld [vmem:[#allocation5 + $0x8c] sm:$0xf]
    %v351 = vld [vmem:[#allocation5 + $0x90] sm:$0xff]
    %v352 = vld [vmem:[#allocation5 + $0x98] sm:$0xf]
    %v353 = vld [vmem:[#allocation5 + $0x9c] sm:$0xff]
    %v354 = vld [vmem:[#allocation5 + $0xa4] sm:$0xf]
    %v355 = vld [vmem:[#allocation5 + $0xa8] sm:$0xff]
    %v356 = vld [vmem:[#allocation5 + $0xb0] sm:$0xf]
    %v357 = vld [vmem:[#allocation5 + $0xb4] sm:$0xff]
    %v358 = vld [vmem:[#allocation5 + $0xbc] sm:$0xf]
    %v359 = vld [vmem:[#allocation5 + $0xc0] sm:$0xff]
    %v360 = vld [vmem:[#allocation5 + $0xc8] sm:$0xf]
    %v361 = vld [vmem:[#allocation5 + $0xcc] sm:$0xff]
    %v362 = vld [vmem:[#allocation5 + $0xd4] sm:$0xf]
    %v363 = vld [vmem:[#allocation5 + $0xd8] sm:$0xff]
    %v364 = vld [vmem:[#allocation5 + $0xe0] sm:$0xf]
    %v365 = vld [vmem:[#allocation5 + $0xe4] sm:$0xff]
    %v366 = vld [vmem:[#allocation5 + $0xec] sm:$0xf]
    %v367 = vld [vmem:[#allocation5 + $0xf0] sm:$0xff]
    %v368 = vld [vmem:[#allocation5 + $0xf8] sm:$0xf]
    %v369 = vld [vmem:[#allocation5 + $0xfc] sm:$0xff]
    %v370 = vld [vmem:[#allocation5 + $0x104] sm:$0xf]
    %v371 = vld [vmem:[#allocation5 + $0x108] sm:$0xff]
    %v372 = vld [vmem:[#allocation5 + $0x110] sm:$0xf]
    %v373 = vld [vmem:[#allocation5 + $0x114] sm:$0xff]
    %v374 = vld [vmem:[#allocation5 + $0x11c] sm:$0xf]
    %v375 = vld [vmem:[#allocation5 + $0x120] sm:$0xff]
    %v376 = vld [vmem:[#allocation5 + $0x128] sm:$0xf]
    %v377 = vld [vmem:[#allocation5 + $0x12c] sm:$0xff]
    %v378 = vld [vmem:[#allocation5 + $0x134] sm:$0xf]
    %v379 = vld [vmem:[#allocation5 + $0x138] sm:$0xff]
    %v380 = vld [vmem:[#allocation5 + $0x140] sm:$0xf]
    %v381 = vld [vmem:[#allocation5 + $0x144] sm:$0xff]
    %v382 = vld [vmem:[#allocation5 + $0x14c] sm:$0xf]
    %v383 = vld [vmem:[#allocation5 + $0x150] sm:$0xff]
    %v384 = vld [vmem:[#allocation5 + $0x158] sm:$0xf]
    %v385 = vld [vmem:[#allocation5 + $0x15c] sm:$0xff]
    %v386 = vld [vmem:[#allocation5 + $0x164] sm:$0xf]
    %v387 = vld [vmem:[#allocation5 + $0x168] sm:$0xff]
    %v388 = vld [vmem:[#allocation5 + $0x170] sm:$0xf]
    %v389 = vld [vmem:[#allocation5 + $0x174] sm:$0xff]
    %v390 = vld [vmem:[#allocation5 + $0x17c] sm:$0xf]
    %v391 = vld [vmem:[#allocation5 + $0x180] sm:$0xff]
    %v392 = vld [vmem:[#allocation5 + $0x188] sm:$0xf]
    %v393 = vld [vmem:[#allocation5 + $0x18c] sm:$0xff]
    %v394 = vld [vmem:[#allocation5 + $0x194] sm:$0xf]
    %v395 = vld [vmem:[#allocation5 + $0x198] sm:$0xff]
    %v396 = vld [vmem:[#allocation5 + $0x1a0] sm:$0xf]
    %v397 = vld [vmem:[#allocation5 + $0x1a4] sm:$0xff]
    %v398 = vld [vmem:[#allocation5 + $0x1ac] sm:$0xf]
    %v399 = vld [vmem:[#allocation5 + $0x1b0] sm:$0xff]
    %v400 = vld [vmem:[#allocation5 + $0x1b8] sm:$0xf]
    %v401 = vld [vmem:[#allocation5 + $0x1bc] sm:$0xff]
    %v402 = vld [vmem:[#allocation5 + $0x1c4] sm:$0xf]
    %v403 = vld [vmem:[#allocation5 + $0x1c8] sm:$0xff]
    %v404 = vld [vmem:[#allocation5 + $0x1d0] sm:$0xf]
    %v405 = vld [vmem:[#allocation5 + $0x1d4] sm:$0xff]
    %v406 = vld [vmem:[#allocation5 + $0x1dc] sm:$0xf]
    %v407 = vld [vmem:[#allocation5 + $0x1e0] sm:$0xff]
    %v408 = vld [vmem:[#allocation5 + $0x1e8] sm:$0xf]
    %v409 = vld [vmem:[#allocation5 + $0x1ec] sm:$0xff]
    %v410 = vld [vmem:[#allocation5 + $0x1f4] sm:$0xf]
    %v411 = vld [vmem:[#allocation5 + $0x1f8] sm:$0xff]
    %v412 = vld [vmem:[#allocation5 + $0x200] sm:$0xf]
    %v413 = vld [vmem:[#allocation5 + $0x204] sm:$0xff]
    %v414 = vld [vmem:[#allocation5 + $0x20c] sm:$0xf]
    %v415 = vld [vmem:[#allocation5 + $0x210] sm:$0xff]
    %v416 = vld [vmem:[#allocation5 + $0x218] sm:$0xf]
    %v417 = vld [vmem:[#allocation5 + $0x21c] sm:$0xff]
    %v418 = vld [vmem:[#allocation5 + $0x224] sm:$0xf]
    %v419 = vld [vmem:[#allocation5 + $0x228] sm:$0xff]
    %v420 = vld [vmem:[#allocation5 + $0x230] sm:$0xf]
    %v421 = vld [vmem:[#allocation5 + $0x234] sm:$0xff]
    %v422 = vld [vmem:[#allocation5 + $0x23c] sm:$0xf]
    %v423 = vld [vmem:[#allocation5 + $0x240] sm:$0xff]
    %v424 = vld [vmem:[#allocation5 + $0x248] sm:$0xf]
    %v425 = vld [vmem:[#allocation5 + $0x24c] sm:$0xff]
    %v426 = vld [vmem:[#allocation5 + $0x254] sm:$0xf]
    %v427 = vld [vmem:[#allocation5 + $0x258] sm:$0xff]
    %v428 = vld [vmem:[#allocation5 + $0x260] sm:$0xf]
    %v429 = vld [vmem:[#allocation5 + $0x264] sm:$0xff]
    %v430 = vld [vmem:[#allocation5 + $0x26c] sm:$0xf]
    %v431 = vld [vmem:[#allocation5 + $0x270] sm:$0xff]
    %v432 = vld [vmem:[#allocation5 + $0x278] sm:$0xf]
    %v433 = vld [vmem:[#allocation5 + $0x27c] sm:$0xff]
    %v434 = vld [vmem:[#allocation5 + $0x284] sm:$0xf]
    %v435 = vld [vmem:[#allocation5 + $0x288] sm:$0xff]
    %v436 = vld [vmem:[#allocation5 + $0x290] sm:$0xf]
    %v437 = vld [vmem:[#allocation5 + $0x294] sm:$0xff]
    %v438 = vld [vmem:[#allocation5 + $0x29c] sm:$0xf]
    %v439 = vld [vmem:[#allocation5 + $0x2a0] sm:$0xff]
    %v440 = vld [vmem:[#allocation5 + $0x2a8] sm:$0xf]
    %v441 = vld [vmem:[#allocation5 + $0x2ac] sm:$0xff]
    %v442 = vld [vmem:[#allocation5 + $0x2b4] sm:$0xf]
    %v443 = vld [vmem:[#allocation5 + $0x2b8] sm:$0xff]
    %v444 = vld [vmem:[#allocation5 + $0x2c0] sm:$0xf]
    %v445 = vld [vmem:[#allocation5 + $0x2c4] sm:$0xff]
    %v446 = vld [vmem:[#allocation5 + $0x2cc] sm:$0xf]
    %v447 = vld [vmem:[#allocation5 + $0x2d0] sm:$0xff]
    %v448 = vld [vmem:[#allocation5 + $0x2d8] sm:$0xf]
    %v449 = vld [vmem:[#allocation5 + $0x2dc] sm:$0xff]
    %v450 = vld [vmem:[#allocation5 + $0x2e4] sm:$0xf]
    %v451 = vld [vmem:[#allocation5 + $0x2e8] sm:$0xff]
    %v452 = vld [vmem:[#allocation5 + $0x2f0] sm:$0xf]
    %v453 = vld [vmem:[#allocation5 + $0x2f4] sm:$0xff]
    %v454 = vld [vmem:[#allocation5 + $0x2fc] sm:$0xf]
    %v455 = vld [vmem:[%s6] sm:$0x7]
    %v457 = vlaneseq
    %v458 = vshrl.u32 %v457, 7
    %v459 = vsub.s32 0, %v458
    %v460 = vrot.slane %v455, %v459
    %v461 = vlaneseq
    %v462 = vshrl.u32 %v461, 7
    %v463 = vsub.s32 1, %v462
    %v464 = vrot.slane %v455, %v463
    %v465 = vlaneseq
    %v466 = vshrl.u32 %v465, 7
    %v467 = vsub.s32 2, %v466
    %v468 = vrot.slane %v455, %v467
    %v600 = vunpack.c.l.b16 %v327
    %v601 = vunpack.c.h.b16 %v327
    %v602 = vunpack.c.l.b16 %v328
    %v603 = vunpack.c.l.b16 %v329
    %v604 = vunpack.c.h.b16 %v329
    %v605 = vunpack.c.l.b16 %v330
    %v606 = vunpack.c.l.b16 %v331
    %v607 = vunpack.c.h.b16 %v331
    %v608 = vunpack.c.l.b16 %v332
    %v609 = vunpack.c.l.b16 %v333
    %v610 = vunpack.c.h.b16 %v333
    %v611 = vunpack.c.l.b16 %v334
    %v612 = vunpack.c.l.b16 %v335
    %v613 = vunpack.c.h.b16 %v335
    %v614 = vunpack.c.l.b16 %v336
    %v615 = vunpack.c.l.b16 %v337
    %v616 = vunpack.c.h.b16 %v337
    %v617 = vunpack.c.l.b16 %v338
    %v618 = vunpack.c.l.b16 %v339
    %v619 = vunpack.c.h.b16 %v339
    %v620 = vunpack.c.l.b16 %v340
    %v621 = vunpack.c.l.b16 %v341
    %v622 = vunpack.c.h.b16 %v341
    %v623 = vunpack.c.l.b16 %v342
    %v624 = vunpack.c.l.b16 %v343
    %v625 = vunpack.c.h.b16 %v343
    %v626 = vunpack.c.l.b16 %v344
    %v627 = vunpack.c.l.b16 %v345
    %v628 = vunpack.c.h.b16 %v345
    %v629 = vunpack.c.l.b16 %v346
    %v630 = vunpack.c.l.b16 %v347
    %v631 = vunpack.c.h.b16 %v347
    %v632 = vunpack.c.l.b16 %v348
    %v633 = vunpack.c.l.b16 %v349
    %v634 = vunpack.c.h.b16 %v349
    %v635 = vunpack.c.l.b16 %v350
    %v636 = vunpack.c.l.b16 %v351
    %v637 = vunpack.c.h.b16 %v351
    %v638 = vunpack.c.l.b16 %v352
    %v639 = vunpack.c.l.b16 %v353
    %v640 = vunpack.c.h.b16 %v353
    %v641 = vunpack.c.l.b16 %v354
    %v642 = vunpack.c.l.b16 %v355
    %v643 = vunpack.c.h.b16 %v355
    %v644 = vunpack.c.l.b16 %v356
    %v645 = vunpack.c.l.b16 %v357
    %v646 = vunpack.c.h.b16 %v357
    %v647 = vunpack.c.l.b16 %v358
    %v648 = vunpack.c.l.b16 %v359
    %v649 = vunpack.c.h.b16 %v359
    %v650 = vunpack.c.l.b16 %v360
    %v651 = vunpack.c.l.b16 %v361
    %v652 = vunpack.c.h.b16 %v361
    %v653 = vunpack.c.l.b16 %v362
    %v654 = vunpack.c.l.b16 %v363
    %v655 = vunpack.c.h.b16 %v363
    %v656 = vunpack.c.l.b16 %v364
    %v657 = vunpack.c.l.b16 %v365
    %v658 = vunpack.c.h.b16 %v365
    %v659 = vunpack.c.l.b16 %v366
    %v660 = vunpack.c.l.b16 %v367
    %v661 = vunpack.c.h.b16 %v367
    %v662 = vunpack.c.l.b16 %v368
    %v663 = vunpack.c.l.b16 %v369
    %v664 = vunpack.c.h.b16 %v369
    %v665 = vunpack.c.l.b16 %v370
    %v666 = vunpack.c.l.b16 %v371
    %v667 = vunpack.c.h.b16 %v371
    %v668 = vunpack.c.l.b16 %v372
    %v669 = vunpack.c.l.b16 %v373
    %v670 = vunpack.c.h.b16 %v373
    %v671 = vunpack.c.l.b16 %v374
    %v672 = vunpack.c.l.b16 %v375
    %v673 = vunpack.c.h.b16 %v375
    %v674 = vunpack.c.l.b16 %v376
    %v675 = vunpack.c.l.b16 %v377
    %v676 = vunpack.c.h.b16 %v377
    %v677 = vunpack.c.l.b16 %v378
    %v678 = vunpack.c.l.b16 %v379
    %v679 = vunpack.c.h.b16 %v379
    %v680 = vunpack.c.l.b16 %v380
    %v681 = vunpack.c.l.b16 %v381
    %v682 = vunpack.c.h.b16 %v381
    %v683 = vunpack.c.l.b16 %v382
    %v684 = vunpack.c.l.b16 %v383
    %v685 = vunpack.c.h.b16 %v383
    %v686 = vunpack.c.l.b16 %v384
    %v687 = vunpack.c.l.b16 %v385
    %v688 = vunpack.c.h.b16 %v385
    %v689 = vunpack.c.l.b16 %v386
    %v690 = vunpack.c.l.b16 %v387
    %v691 = vunpack.c.h.b16 %v387
    %v692 = vunpack.c.l.b16 %v388
    %v693 = vunpack.c.l.b16 %v389
    %v694 = vunpack.c.h.b16 %v389
    %v695 = vunpack.c.l.b16 %v390
    %v696 = vunpack.c.l.b16 %v391
    %v697 = vunpack.c.h.b16 %v391
    %v698 = vunpack.c.l.b16 %v392
    %v699 = vunpack.c.l.b16 %v393
    %v700 = vunpack.c.h.b16 %v393
    %v701 = vunpack.c.l.b16 %v394
    %v702 = vunpack.c.l.b16 %v395
    %v703 = vunpack.c.h.b16 %v395
    %v704 = vunpack.c.l.b16 %v396
    %v705 = vunpack.c.l.b16 %v397
    %v706 = vunpack.c.h.b16 %v397
    %v707 = vunpack.c.l.b16 %v398
    %v708 = vunpack.c.l.b16 %v399
    %v709 = vunpack.c.h.b16 %v399
    %v710 = vunpack.c.l.b16 %v400
    %v711 = vunpack.c.l.b16 %v401
    %v712 = vunpack.c.h.b16 %v401
    %v713 = vunpack.c.l.b16 %v402
    %v714 = vunpack.c.l.b16 %v403
    %v715 = vunpack.c.h.b16 %v403
    %v716 = vunpack.c.l.b16 %v404
    %v717 = vunpack.c.l.b16 %v405
    %v718 = vunpack.c.h.b16 %v405
    %v719 = vunpack.c.l.b16 %v406
    %v720 = vunpack.c.l.b16 %v407
    %v721 = vunpack.c.h.b16 %v407
    %v722 = vunpack.c.l.b16 %v408
    %v723 = vunpack.c.l.b16 %v409
    %v724 = vunpack.c.h.b16 %v409
    %v725 = vunpack.c.l.b16 %v410
    %v726 = vunpack.c.l.b16 %v411
    %v727 = vunpack.c.h.b16 %v411
    %v728 = vunpack.c.l.b16 %v412
    %v729 = vunpack.c.l.b16 %v413
    %v730 = vunpack.c.h.b16 %v413
    %v731 = vunpack.c.l.b16 %v414
    %v732 = vunpack.c.l.b16 %v415
    %v733 = vunpack.c.h.b16 %v415
    %v734 = vunpack.c.l.b16 %v416
    %v735 = vunpack.c.l.b16 %v417
    %v736 = vunpack.c.h.b16 %v417
    %v737 = vunpack.c.l.b16 %v418
    %v738 = vunpack.c.l.b16 %v419
    %v739 = vunpack.c.h.b16 %v419
    %v740 = vunpack.c.l.b16 %v420
    %v741 = vunpack.c.l.b16 %v421
    %v742 = vunpack.c.h.b16 %v421
    %v743 = vunpack.c.l.b16 %v422
    %v744 = vunpack.c.l.b16 %v423
    %v745 = vunpack.c.h.b16 %v423
    %v746 = vunpack.c.l.b16 %v424
    %v747 = vunpack.c.l.b16 %v425
    %v748 = vunpack.c.h.b16 %v425
    %v749 = vunpack.c.l.b16 %v426
    %v750 = vunpack.c.l.b16 %v427
    %v751 = vunpack.c.h.b16 %v427
    %v752 = vunpack.c.l.b16 %v428
    %v753 = vunpack.c.l.b16 %v429
    %v754 = vunpack.c.h.b16 %v429
    %v755 = vunpack.c.l.b16 %v430
    %v756 = vunpack.c.l.b16 %v431
    %v757 = vunpack.c.h.b16 %v431
    %v758 = vunpack.c.l.b16 %v432
    %v759 = vunpack.c.l.b16 %v433
    %v760 = vunpack.c.h.b16 %v433
    %v761 = vunpack.c.l.b16 %v434
    %v762 = vunpack.c.l.b16 %v435
    %v763 = vunpack.c.h.b16 %v435
    %v764 = vunpack.c.l.b16 %v436
    %v765 = vunpack.c.l.b16 %v437
    %v766 = vunpack.c.h.b16 %v437
    %v767 = vunpack.c.l.b16 %v438
    %v768 = vunpack.c.l.b16 %v439
    %v769 = vunpack.c.h.b16 %v439
    %v770 = vunpack.c.l.b16 %v440
    %v771 = vunpack.c.l.b16 %v441
    %v772 = vunpack.c.h.b16 %v441
    %v773 = vunpack.c.l.b16 %v442
    %v774 = vunpack.c.l.b16 %v443
    %v775 = vunpack.c.h.b16 %v443
    %v776 = vunpack.c.l.b16 %v444
    %v777 = vunpack.c.l.b16 %v445
    %v778 = vunpack.c.h.b16 %v445
    %v779 = vunpack.c.l.b16 %v446
    %v780 = vunpack.c.l.b16 %v447
    %v781 = vunpack.c.h.b16 %v447
    %v782 = vunpack.c.l.b16 %v448
    %v783 = vunpack.c.l.b16 %v449
    %v784 = vunpack.c.h.b16 %v449
    %v785 = vunpack.c.l.b16 %v450
    %v786 = vunpack.c.l.b16 %v451
    %v787 = vunpack.c.h.b16 %v451
    %v788 = vunpack.c.l.b16 %v452
    %v789 = vunpack.c.l.b16 %v453
    %v790 = vunpack.c.h.b16 %v453
    %v791 = vunpack.c.l.b16 %v454
    %v792 = vpack.c.b16 %v603, %v600
    %v793 = vpack.c.b16 %v604, %v601
    %v794 = vpack.c.b16 %v605, %v602
    %v795 = vpack.c.b16 %v609, %v606
    %v796 = vpack.c.b16 %v610, %v607
    %v797 = vpack.c.b16 %v611, %v608
    %v798 = vpack.c.b16 %v615, %v612
    %v799 = vpack.c.b16 %v616, %v613
    %v800 = vpack.c.b16 %v617, %v614
    %v801 = vpack.c.b16 %v621, %v618
    %v802 = vpack.c.b16 %v622, %v619
    %v803 = vpack.c.b16 %v623, %v620
    %v804 = vpack.c.b16 %v627, %v624
    %v805 = vpack.c.b16 %v628, %v625
    %v806 = vpack.c.b16 %v629, %v626
    %v807 = vpack.c.b16 %v633, %v630
    %v808 = vpack.c.b16 %v634, %v631
    %v809 = vpack.c.b16 %v635, %v632
    %v810 = vpack.c.b16 %v639, %v636
    %v811 = vpack.c.b16 %v640, %v637
    %v812 = vpack.c.b16 %v641, %v638
    %v813 = vpack.c.b16 %v645, %v642
    %v814 = vpack.c.b16 %v646, %v643
    %v815 = vpack.c.b16 %v647, %v644
    %v816 = vpack.c.b16 %v651, %v648
    %v817 = vpack.c.b16 %v652, %v649
    %v818 = vpack.c.b16 %v653, %v650
    %v819 = vpack.c.b16 %v657, %v654
    %v820 = vpack.c.b16 %v658, %v655
    %v821 = vpack.c.b16 %v659, %v656
    %v822 = vpack.c.b16 %v663, %v660
    %v823 = vpack.c.b16 %v664, %v661
    %v824 = vpack.c.b16 %v665, %v662
    %v825 = vpack.c.b16 %v669, %v666
    %v826 = vpack.c.b16 %v670, %v667
    %v827 = vpack.c.b16 %v671, %v668
    %v828 = vpack.c.b16 %v675, %v672
    %v829 = vpack.c.b16 %v676, %v673
    %v830 = vpack.c.b16 %v677, %v674
    %v831 = vpack.c.b16 %v681, %v678
    %v832 = vpack.c.b16 %v682, %v679
    %v833 = vpack.c.b16 %v683, %v680
    %v834 = vpack.c.b16 %v687, %v684
    %v835 = vpack.c.b16 %v688, %v685
    %v836 = vpack.c.b16 %v689, %v686
    %v837 = vpack.c.b16 %v693, %v690
    %v838 = vpack.c.b16 %v694, %v691
    %v839 = vpack.c.b16 %v695, %v692
    %v840 = vpack.c.b16 %v699, %v696
    %v841 = vpack.c.b16 %v700, %v697
    %v842 = vpack.c.b16 %v701, %v698
    %v843 = vpack.c.b16 %v705, %v702
    %v844 = vpack.c.b16 %v706, %v703
    %v845 = vpack.c.b16 %v707, %v704
    %v846 = vpack.c.b16 %v711, %v708
    %v847 = vpack.c.b16 %v712, %v709
    %v848 = vpack.c.b16 %v713, %v710
    %v849 = vpack.c.b16 %v717, %v714
    %v850 = vpack.c.b16 %v718, %v715
    %v851 = vpack.c.b16 %v719, %v716
    %v852 = vpack.c.b16 %v723, %v720
    %v853 = vpack.c.b16 %v724, %v721
    %v854 = vpack.c.b16 %v725, %v722
    %v855 = vpack.c.b16 %v729, %v726
    %v856 = vpack.c.b16 %v730, %v727
    %v857 = vpack.c.b16 %v731, %v728
    %v858 = vpack.c.b16 %v735, %v732
    %v859 = vpack.c.b16 %v736, %v733
    %v860 = vpack.c.b16 %v737, %v734
    %v861 = vpack.c.b16 %v741, %v738
    %v862 = vpack.c.b16 %v742, %v739
    %v863 = vpack.c.b16 %v743, %v740
    %v864 = vpack.c.b16 %v747, %v744
    %v865 = vpack.c.b16 %v748, %v745
    %v866 = vpack.c.b16 %v749, %v746
    %v867 = vpack.c.b16 %v753, %v750
    %v868 = vpack.c.b16 %v754, %v751
    %v869 = vpack.c.b16 %v755, %v752
    %v870 = vpack.c.b16 %v759, %v756
    %v871 = vpack.c.b16 %v760, %v757
    %v872 = vpack.c.b16 %v761, %v758
    %v873 = vpack.c.b16 %v765, %v762
    %v874 = vpack.c.b16 %v766, %v763
    %v875 = vpack.c.b16 %v767, %v764
    %v876 = vpack.c.b16 %v771, %v768
    %v877 = vpack.c.b16 %v772, %v769
    %v878 = vpack.c.b16 %v773, %v770
    %v879 = vpack.c.b16 %v777, %v774
    %v880 = vpack.c.b16 %v778, %v775
    %v881 = vpack.c.b16 %v779, %v776
    %v882 = vpack.c.b16 %v783, %v780
    %v883 = vpack.c.b16 %v784, %v781
    %v884 = vpack.c.b16 %v785, %v782
    %v885 = vpack.c.b16 %v789, %v786
    %v886 = vpack.c.b16 %v790, %v787
    %v887 = vpack.c.b16 %v791, %v788
    %984 = vmatprep.subr.bf16.mxu0 %v793
    %985 = vmatpush1.bf16.msra.mxu0 %v792
    %986 = vmatprep.subr.bf16.mxu0 %v796
    %987 = vmatpush1.bf16.msra.mxu0 %v795
    %988 = vmatprep.subr.bf16.mxu0 %v799
    %989 = vmatpush1.bf16.msra.mxu0 %v798
    %990 = vmatprep.subr.bf16.mxu0 %v802
    %991 = vmatpush1.bf16.msra.mxu0 %v801
    %992 = vmatprep.subr.bf16.mxu0 %v805
    %993 = vmatpush1.bf16.msra.mxu0 %v804
    %994 = vmatprep.subr.bf16.mxu0 %v808
    %995 = vmatpush1.bf16.msra.mxu0 %v807
    %996 = vmatprep.subr.bf16.mxu0 %v811
    %997 = vmatpush1.bf16.msra.mxu0 %v810
    %998 = vmatprep.subr.bf16.mxu0 %v814
    %999 = vmatpush1.bf16.msra.mxu0 %v813
    %1000 = vmatprep.subr.bf16.mxu0 %v817
    %1001 = vmatpush1.bf16.msra.mxu0 %v816
    %1002 = vmatprep.subr.bf16.mxu0 %v820
    %1003 = vmatpush1.bf16.msra.mxu0 %v819
    %1004 = vmatprep.subr.bf16.mxu0 %v823
    %1005 = vmatpush1.bf16.msra.mxu0 %v822
    %1006 = vmatprep.subr.bf16.mxu0 %v826
    %1007 = vmatpush1.bf16.msra.mxu0 %v825
    %1008 = vmatprep.subr.bf16.mxu0 %v829
    %1009 = vmatpush1.bf16.msra.mxu0 %v828
    %1010 = vmatprep.subr.bf16.mxu0 %v832
    %1011 = vmatpush1.bf16.msra.mxu0 %v831
    %1012 = vmatprep.subr.bf16.mxu0 %v835
    %1013 = vmatpush1.bf16.msra.mxu0 %v834
    %1014 = vmatprep.subr.bf16.mxu0 %v838
    %1015 = vmatpush1.bf16.msra.mxu0 %v837
    %1016 = vmatprep.mubr.bf16.mxu0 %v324
    %1017 = vmatmul.mubr.bf16.gmra.mrb[0].mxu0 %v323
    %v1018 = vpop.f32.mrb[0].mxu0
    %v1019 = vadd.f32 %v460, %v1018
    %v1020 = vpop.f32.mrb[0].mxu0
    %v1021 = vadd.f32 %v464, %v1020
    %v1022 = vpop.f32.mrb[0].mxu0
    %v1023 = vpop.f32.mrb[0].mxu0
    %1024 = vdwg.mxu0
    %1025 = vmatprep.subr.bf16.mxu0 %v841
    %1026 = vmatpush1.bf16.msra.mxu0 %v840
    %1027 = vmatprep.subr.bf16.mxu0 %v844
    %1028 = vmatpush1.bf16.msra.mxu0 %v843
    %1029 = vmatprep.subr.bf16.mxu0 %v847
    %1030 = vmatpush1.bf16.msra.mxu0 %v846
    %1031 = vmatprep.subr.bf16.mxu0 %v850
    %1032 = vmatpush1.bf16.msra.mxu0 %v849
    %1033 = vmatprep.subr.bf16.mxu0 %v853
    %1034 = vmatpush1.bf16.msra.mxu0 %v852
    %1035 = vmatprep.subr.bf16.mxu0 %v856
    %1036 = vmatpush1.bf16.msra.mxu0 %v855
    %1037 = vmatprep.subr.bf16.mxu0 %v859
    %1038 = vmatpush1.bf16.msra.mxu0 %v858
    %1039 = vmatprep.subr.bf16.mxu0 %v862
    %1040 = vmatpush1.bf16.msra.mxu0 %v861
    %1041 = vmatprep.subr.bf16.mxu0 %v865
    %1042 = vmatpush1.bf16.msra.mxu0 %v864
    %1043 = vmatprep.subr.bf16.mxu0 %v868
    %1044 = vmatpush1.bf16.msra.mxu0 %v867
    %1045 = vmatprep.subr.bf16.mxu0 %v871
    %1046 = vmatpush1.bf16.msra.mxu0 %v870
    %1047 = vmatprep.subr.bf16.mxu0 %v874
    %1048 = vmatpush1.bf16.msra.mxu0 %v873
    %1049 = vmatprep.subr.bf16.mxu0 %v877
    %1050 = vmatpush1.bf16.msra.mxu0 %v876
    %1051 = vmatprep.subr.bf16.mxu0 %v880
    %1052 = vmatpush1.bf16.msra.mxu0 %v879
    %1053 = vmatprep.subr.bf16.mxu0 %v883
    %1054 = vmatpush1.bf16.msra.mxu0 %v882
    %1055 = vmatprep.subr.bf16.mxu0 %v886
    %1056 = vmatpush1.bf16.msra.mxu0 %v885
    %1057 = vmatprep.mubr.bf16.mxu0 %v326
    %1058 = vmatmul.mubr.bf16.gmra.mrb[0].mxu0 %v325
    %v1059 = vpop.f32.mrb[0].mxu0
    %v1060 = vadd.f32 %v1019, %v1059
    %v1061 = vpop.f32.mrb[0].mxu0
    %v1062 = vadd.f32 %v1021, %v1061
    %v1063 = vpop.f32.mrb[0].mxu0
    %v1064 = vpop.f32.mrb[0].mxu0
    %1065 = vdwg.mxu0
    %1066 = vmatprep.subr.bf16.mxu0 0
    %1067 = vmatpush1.bf16.msra.mxu0 %v794
    %1068 = vmatprep.subr.bf16.mxu0 0
    %1069 = vmatpush1.bf16.msra.mxu0 %v797
    %1070 = vmatprep.subr.bf16.mxu0 0
    %1071 = vmatpush1.bf16.msra.mxu0 %v800
    %1072 = vmatprep.subr.bf16.mxu0 0
    %1073 = vmatpush1.bf16.msra.mxu0 %v803
    %1074 = vmatprep.subr.bf16.mxu0 0
    %1075 = vmatpush1.bf16.msra.mxu0 %v806
    %1076 = vmatprep.subr.bf16.mxu0 0
    %1077 = vmatpush1.bf16.msra.mxu0 %v809
    %1078 = vmatprep.subr.bf16.mxu0 0
    %1079 = vmatpush1.bf16.msra.mxu0 %v812
    %1080 = vmatprep.subr.bf16.mxu0 0
    %1081 = vmatpush1.bf16.msra.mxu0 %v815
    %1082 = vmatprep.subr.bf16.mxu0 0
    %1083 = vmatpush1.bf16.msra.mxu0 %v818
    %1084 = vmatprep.subr.bf16.mxu0 0
    %1085 = vmatpush1.bf16.msra.mxu0 %v821
    %1086 = vmatprep.subr.bf16.mxu0 0
    %1087 = vmatpush1.bf16.msra.mxu0 %v824
    %1088 = vmatprep.subr.bf16.mxu0 0
    %1089 = vmatpush1.bf16.msra.mxu0 %v827
    %1090 = vmatprep.subr.bf16.mxu0 0
    %1091 = vmatpush1.bf16.msra.mxu0 %v830
    %1092 = vmatprep.subr.bf16.mxu0 0
    %1093 = vmatpush1.bf16.msra.mxu0 %v833
    %1094 = vmatprep.subr.bf16.mxu0 0
    %1095 = vmatpush1.bf16.msra.mxu0 %v836
    %1096 = vmatprep.subr.bf16.mxu0 0
    %1097 = vmatpush1.bf16.msra.mxu0 %v839
    %1098 = vmatprep.mubr.bf16.mxu0 %v324
    %1099 = vmatmul.mubr.bf16.gmra.mrb[0].mxu0 %v323
    %v1100 = vpop.f32.mrb[0].mxu0
    %v1101 = vadd.f32 %v468, %v1100
    %v1102 = vpop.f32.mrb[0].mxu0
    %v1103 = vpop.f32.mrb[0].mxu0
    %v1104 = vpop.f32.mrb[0].mxu0
    %1105 = vdwg.mxu0
    %1106 = vmatprep.subr.bf16.mxu0 0
    %1107 = vmatpush1.bf16.msra.mxu0 %v842
    %1108 = vmatprep.subr.bf16.mxu0 0
    %1109 = vmatpush1.bf16.msra.mxu0 %v845
    %1110 = vmatprep.subr.bf16.mxu0 0
    %1111 = vmatpush1.bf16.msra.mxu0 %v848
    %1112 = vmatprep.subr.bf16.mxu0 0
    %1113 = vmatpush1.bf16.msra.mxu0 %v851
    %1114 = vmatprep.subr.bf16.mxu0 0
    %1115 = vmatpush1.bf16.msra.mxu0 %v854
    %1116 = vmatprep.subr.bf16.mxu0 0
    %1117 = vmatpush1.bf16.msra.mxu0 %v857
    %1118 = vmatprep.subr.bf16.mxu0 0
    %1119 = vmatpush1.bf16.msra.mxu0 %v860
    %1120 = vmatprep.subr.bf16.mxu0 0
    %1121 = vmatpush1.bf16.msra.mxu0 %v863
    %1122 = vmatprep.subr.bf16.mxu0 0
    %1123 = vmatpush1.bf16.msra.mxu0 %v866
    %1124 = vmatprep.subr.bf16.mxu0 0
    %1125 = vmatpush1.bf16.msra.mxu0 %v869
    %1126 = vmatprep.subr.bf16.mxu0 0
    %1127 = vmatpush1.bf16.msra.mxu0 %v872
    %1128 = vmatprep.subr.bf16.mxu0 0
    %1129 = vmatpush1.bf16.msra.mxu0 %v875
    %1130 = vmatprep.subr.bf16.mxu0 0
    %1131 = vmatpush1.bf16.msra.mxu0 %v878
    %1132 = vmatprep.subr.bf16.mxu0 0
    %1133 = vmatpush1.bf16.msra.mxu0 %v881
    %1134 = vmatprep.subr.bf16.mxu0 0
    %1135 = vmatpush1.bf16.msra.mxu0 %v884
    %1136 = vmatprep.subr.bf16.mxu0 0
    %1137 = vmatpush1.bf16.msra.mxu0 %v887
    %1138 = vmatprep.mubr.bf16.mxu0 %v326
    %1139 = vmatmul.mubr.bf16.gmra.mrb[0].mxu0 %v325
    %v1140 = vpop.f32.mrb[0].mxu0
    %v1141 = vadd.f32 %v1101, %v1140
    %v1142 = vpop.f32.mrb[0].mxu0
    %v1143 = vpop.f32.mrb[0].mxu0
    %v1144 = vpop.f32.mrb[0].mxu0
    %1145 = vdwg.mxu0
    %v1146 = vmax.f32 %v1060, 0.0
    %v1147 = vmax.f32 %v1062, 0.0
    %v1148 = vmax.f32 %v1141, 0.0
    %v1149 = vpack.c.bf16 %v1146, %v1146
    %v1150 = vpack.c.bf16 %v1147, %v1147
    %v1151 = vpack.c.bf16 %v1148, %v1148
    %v1152 = vunpack.c.l.bf16 %v1149
    %v1153 = vunpack.c.l.bf16 %v1150
    %v1154 = vunpack.c.l.bf16 %v1151
    %v1155 = vld [vmem:[%s7] sm:$0x7]
    %v1157 = vlaneseq
    %v1158 = vshrl.u32 %v1157, 7
    %v1159 = vsub.s32 0, %v1158
    %v1160 = vrot.slane %v1155, %v1159
    %v1161 = vlaneseq
    %v1162 = vshrl.u32 %v1161, 7
    %v1163 = vsub.s32 1, %v1162
    %v1164 = vrot.slane %v1155, %v1163
    %v1165 = vlaneseq
    %v1166 = vshrl.u32 %v1165, 7
    %v1167 = vsub.s32 2, %v1166
    %v1168 = vrot.slane %v1155, %v1167
    %v1172 = vmul.f32 %v1152, %v1160
    %v1173 = vmul.f32 %v1153, %v1164
    %v1174 = vmul.f32 %v1154, %v1168
    %v1175 = vadd.f32 %v1172, %v1173
    %v1176 = vadd.f32 %v1175, %v1174
    %1177 = vadd.xlane.f32.xlu0 %v1176
    %v1178 = vpop.xlane.xlu0 %1177
    %v1179 = vld [vmem:[#allocation2] sm:$0x1]
    %v1181 = vlaneseq
    %v1182 = vshrl.u32 %v1181, 7
    %v1183 = vsub.s32 0, %v1182
    %v1184 = vrot.slane %v1179, %v1183
    %v1186 = vadd.f32 %v1178, %v1184
    %vm1187 = vcmask 7168
    %1188 = vst.msk [vmem:[%s9] sm:$0xff] %vm1187, %v1186
    // Predicated region
    $region46: #{tpu_custom_call.1} parent=1 // pred_check
      _
    $region47: #{tpu_custom_call.1} parent=1 // pred_check_branch
      %1190 = sbr.rel (0) target = $region49
    $region48: #{tpu_custom_call.1} parent=1 // pred_region
      _
    $region49: #{tpu_custom_call.1} parent=1 // pred_fallthru
      _
    // Predicated region
    $region50: #{tpu_custom_call.1} parent=1 // pred_check
      _
    $region51: #{tpu_custom_call.1} parent=1 // pred_check_branch
      %1192 = sbr.rel (0) target = $region53
    $region52: #{tpu_custom_call.1} parent=1 // pred_region
      _
    $region53: #{tpu_custom_call.1} parent=1 // pred_fallthru
      _
    %1193 = vsyncpa [#allocation4], 1
    %1194 = vsyncpa [#allocation6], 1

</llo_original>
